<compile_context>
chip_gen: v5e
topology: v5e:2x2
jax: 0.10.0
libtpu: 0.0.40
codegen_flags: <defaults>
</compile_context>

<pallas_src>
import functools

import jax
import jax.numpy as jnp
from jax import lax
from jax.experimental import pallas as pl
from jax.experimental.pallas import tpu as pltpu


# ---------------------------------------------------------------------------
# Kernel 1: fused Q|K|V projection  (one MXU matmul, f32 accumulation).
# ---------------------------------------------------------------------------
def _qkv_proj_kernel(x_ref, w_ref, b_ref, q_ref, k_ref, v_ref, *, qdim):
    acc = jnp.dot(x_ref[...], w_ref[...], preferred_element_type=jnp.float32)
    acc = acc + b_ref[...]                      # bias stays f32
    # 1/sqrt(D) is already folded into the Q columns of w/b (see wrapper).
    q_ref[...] = acc[:, 0 * qdim:1 * qdim].astype(q_ref.dtype)
    k_ref[...] = acc[:, 1 * qdim:2 * qdim].astype(k_ref.dtype)
    v_ref[...] = acc[:, 2 * qdim:3 * qdim].astype(v_ref.dtype)


# ---------------------------------------------------------------------------
# Kernel 2: causal flash attention (online softmax over a KV grid axis).
# ---------------------------------------------------------------------------
def _flash_attn_kernel(q_ref, k_ref, v_ref, o_ref, m_ref, l_ref, acc_ref,
                       *, q_blk, kv_blk, approx_reciprocal):
    qi = pl.program_id(1)
    ki = pl.program_id(2)
    nk = pl.num_programs(2)

    @pl.when(ki == 0)
    def _init():
        m_ref[...] = jnp.full_like(m_ref, -jnp.inf)
        l_ref[...] = jnp.zeros_like(l_ref)
        acc_ref[...] = jnp.zeros_like(acc_ref)

    # Skip KV blocks that lie entirely above the causal diagonal.
    @pl.when(ki * kv_blk <= qi * q_blk + (q_blk - 1))
    def _compute():
        q = q_ref[...]                          # (q_blk, D)  (bf16 on perf path)
        k = k_ref[...]                          # (kv_blk, D)
        v = v_ref[...]                          # (kv_blk, D)

        # q @ k^T as a last-axis contraction (no explicit transpose); bf16 MXU
        # operands with f32 accumulation.
        s = lax.dot_general(q, k, (((1,), (1,)), ((), ())),
                            preferred_element_type=jnp.float32)

        # Causal mask from block indices (only the diagonal block actually has
        # masked entries; fully-masked blocks never reach this point).
        row = qi * q_blk + lax.broadcasted_iota(jnp.int32, (q_blk, kv_blk), 0)
        col = ki * kv_blk + lax.broadcasted_iota(jnp.int32, (q_blk, kv_blk), 1)
        s = jnp.where(col <= row, s, -jnp.inf)

        # Online softmax update (all elementwise math in f32 — v5e-safe).
        m_prev = m_ref[...]
        m_new = jnp.maximum(m_prev, jnp.max(s, axis=-1, keepdims=True))
        alpha = jnp.exp(m_prev - m_new)
        p = jnp.exp(s - m_new)
        l_ref[...] = alpha * l_ref[...] + jnp.sum(p, axis=-1, keepdims=True)
        acc_ref[...] = alpha * acc_ref[...] + jnp.dot(
            p.astype(v.dtype), v, preferred_element_type=jnp.float32)
        m_ref[...] = m_new

    @pl.when(ki == nk - 1)
    def _finalize():
        if approx_reciprocal:
            # Opt-in EUP approx reciprocal (NOT used on the exact path — the
            # bf16-accuracy reciprocal was the cause of the earlier mismatch).
            inv_l = pl.reciprocal(l_ref[...], approx=True)
            o_ref[...] = (acc_ref[...] * inv_l).astype(o_ref.dtype)
        else:
            o_ref[...] = (acc_ref[...] / l_ref[...]).astype(o_ref.dtype)


# ---------------------------------------------------------------------------
# Wrapper.
# ---------------------------------------------------------------------------
def _largest_divisor_leq(n, cap, prefer_multiple_of=1):
    cap = max(1, min(n, cap))
    fallback = 1
    for d in range(cap, 0, -1):
        if n % d == 0:
            if fallback == 1:
                fallback = d
            if d % prefer_multiple_of == 0:
                return d
    return fallback


def _vmem_limit(block_bytes, scratch_bytes=0):
    # 2x for double-buffered pipeline blocks, 2x slack + 4 MiB headroom;
    # clamp to [16 MiB, 64 MiB] so the same setting fits v7x's 64 MiB VMEM.
    est = 2 * (2 * block_bytes + scratch_bytes) + (4 << 20)
    return int(max(min(est, 64 << 20), 16 << 20))


def attention_pallas(x, wq, bq, wk, bk, wv, bv, *,
                     q_block=None, kv_block=None, row_block=None,
                     matmul_dtype=jnp.bfloat16, out_dtype=jnp.float32,
                     approx_reciprocal=False):
    """x: [B, C, E]; w*: [E, D]; b*: [1, D] or [D].  Returns [B, C, D].

    matmul_dtype=jnp.bfloat16 (default): all MXU operands (x/W, q/k, p/v) in
    bf16 with f32 accumulation.  matmul_dtype=None: exact f32 everywhere.
    """
    B, C, E = x.shape
    D = wq.shape[1]
    f32 = jnp.float32

    # Fold 1/sqrt(D) into the Q projection; fuse Q|K|V into one weight.
    scale = jnp.asarray(D, f32) ** jnp.asarray(-0.5, f32)
    w_qkv = jnp.concatenate(
        [wq.astype(f32) * scale, wk.astype(f32), wv.astype(f32)], axis=1)
    b_qkv = jnp.concatenate(
        [jnp.reshape(bq, (1, -1)).astype(f32) * scale,
         jnp.reshape(bk, (1, -1)).astype(f32),
         jnp.reshape(bv, (1, -1)).astype(f32)], axis=1)

    mxu_dtype = f32 if matmul_dtype is None else matmul_dtype
    qkv_dtype = mxu_dtype       # q/k/v intermediates stored at MXU-operand dtype

    rows = B * C
    x_flat = x.reshape(rows, E).astype(mxu_dtype)
    w_qkv = w_qkv.astype(mxu_dtype)

    # ----- Kernel 1: fused QKV projection ---------------------------------
    if row_block is None:
        # Target a large MXU M-dim per step (>=256 ideal on v6e/v7x).
        row_block = _largest_divisor_leq(rows, 512, prefer_multiple_of=8)
    assert rows % row_block == 0

    in_isz = jnp.dtype(mxu_dtype).itemsize
    qkv_isz = jnp.dtype(qkv_dtype).itemsize
    proj_block_bytes = (row_block * E * in_isz + E * 3 * D * in_isz
                        + 3 * D * 4 + 3 * row_block * D * qkv_isz)

    q2d, k2d, v2d = pl.pallas_call(
        functools.partial(_qkv_proj_kernel, qdim=D),
        out_shape=[jax.ShapeDtypeStruct((rows, D), qkv_dtype)] * 3,
        grid_spec=pltpu.PrefetchScalarGridSpec(
            num_scalar_prefetch=0,
            grid=(rows // row_block,),
            in_specs=[
                pl.BlockSpec((row_block, E), lambda i: (i, 0)),   # x (flattened)
                pl.BlockSpec((E, 3 * D), lambda i: (0, 0)),       # fused W_qkv
                pl.BlockSpec((1, 3 * D), lambda i: (0, 0)),       # fused b_qkv
            ],
            out_specs=[pl.BlockSpec((row_block, D), lambda i: (i, 0))] * 3,
        ),
        compiler_params=pltpu.CompilerParams(
            dimension_semantics=("parallel",),
            vmem_limit_bytes=_vmem_limit(proj_block_bytes)),
    )(x_flat, w_qkv, b_qkv)

    # Free (metadata-only) reshape of the lane-dense 2-D outputs.
    q3 = q2d.reshape(B, C, D)
    k3 = k2d.reshape(B, C, D)
    v3 = v2d.reshape(B, C, D)

    # ----- Kernel 2: flash attention ---------------------------------------
    if q_block is None:
        q_block = _largest_divisor_leq(C, 256, prefer_multiple_of=8)
    if kv_block is None:
        kv_block = _largest_divisor_leq(C, 256, prefer_multiple_of=8)
    assert C % q_block == 0 and C % kv_block == 0
    nq, nk = C // q_block, C // kv_block

    out_isz = jnp.dtype(out_dtype).itemsize
    attn_block_bytes = (q_block * D * qkv_isz + 2 * kv_block * D * qkv_isz
                        + q_block * D * out_isz)
    attn_scratch_bytes = 2 * q_block * 4 + q_block * D * 4

    kernel = functools.partial(_flash_attn_kernel, q_blk=q_block,
                               kv_blk=kv_block,
                               approx_reciprocal=approx_reciprocal)

    return pl.pallas_call(
        kernel,
        out_shape=jax.ShapeDtypeStruct((B, C, D), out_dtype),
        grid_spec=pltpu.PrefetchScalarGridSpec(
            num_scalar_prefetch=0,
            grid=(B, nq, nk),                    # kv (reduction) axis last
            in_specs=[
                pl.BlockSpec((None, q_block, D), lambda b, qi, ki: (b, qi, 0)),
                pl.BlockSpec((None, kv_block, D), lambda b, qi, ki: (b, ki, 0)),
                pl.BlockSpec((None, kv_block, D), lambda b, qi, ki: (b, ki, 0)),
            ],
            out_specs=pl.BlockSpec((None, q_block, D),
                                   lambda b, qi, ki: (b, qi, 0)),
            scratch_shapes=[
                pltpu.VMEM((q_block, 1), jnp.float32),   # running max m
                pltpu.VMEM((q_block, 1), jnp.float32),   # running denom l
                pltpu.VMEM((q_block, D), jnp.float32),   # output accumulator
            ],
        ),
        compiler_params=pltpu.CompilerParams(
            dimension_semantics=("parallel", "parallel", "arbitrary"),
            vmem_limit_bytes=_vmem_limit(attn_block_bytes, attn_scratch_bytes)),
    )(q3, k3, v3)


# ---------------------------------------------------------------------------
# Pure-JAX reference mirroring the PyTorch forward exactly.
# ---------------------------------------------------------------------------
def attention_reference(x, wq, bq, wk, bk, wv, bv):
    D = wq.shape[1]
    hp = lax.Precision.HIGHEST
    q = jnp.matmul(x, wq, precision=hp) + bq
    k = jnp.matmul(x, wk, precision=hp) + bk
    v = jnp.matmul(x, wv, precision=hp) + bv
    scores = jnp.matmul(q, jnp.swapaxes(k, -2, -1), precision=hp) * (D ** -0.5)
    C = x.shape[1]
    mask = jnp.tril(jnp.ones((C, C), dtype=bool))
    scores = jnp.where(mask, scores, -jnp.inf)
    w = jax.nn.softmax(scores, axis=-1)
    return jnp.matmul(w, v, precision=hp)


if __name__ == "__main__":
    # Small shapes consistent with the module: batch=2, seq (C)=8,
    # emb_dim=32, query_dim=16, context_length >= C.
    B, C, E, D = 2, 8, 32, 16

    key = jax.random.PRNGKey(0)
    kx, kq, kbq, kk, kbk, kv, kbv = jax.random.split(key, 7)

    # Deterministic init (mimics nn.Linear uniform(-1/sqrt(E), 1/sqrt(E))).
    bound = 1.0 / (E ** 0.5)
    x = jax.random.normal(kx, (B, C, E), dtype=jnp.float32)
    wq = jax.random.uniform(kq, (E, D), jnp.float32, -bound, bound)
    bq = jax.random.uniform(kbq, (1, D), jnp.float32, -bound, bound)
    wk = jax.random.uniform(kk, (E, D), jnp.float32, -bound, bound)
    bk = jax.random.uniform(kbk, (1, D), jnp.float32, -bound, bound)
    wv = jax.random.uniform(kv, (E, D), jnp.float32, -bound, bound)
    bv = jax.random.uniform(kbv, (1, D), jnp.float32, -bound, bound)

    ref = attention_reference(x, wq, bq, wk, bk, wv, bv)

    # Exact f32 path (matches the PyTorch module numerics).
    out_f32 = jax.block_until_ready(
        attention_pallas(x, wq, bq, wk, bk, wv, bv, matmul_dtype=None))
    assert out_f32.shape == (B, C, D)
    assert jnp.allclose(out_f32, ref, atol=5e-3, rtol=5e-3), \
        "f32 mismatch vs reference"

    # Default perf path: bf16 MXU operands everywhere, f32 accumulation +
    # f32 softmax (looser tolerance due to bf16 operand rounding).
    out_bf16 = jax.block_until_ready(
        attention_pallas(x, wq, bq, wk, bk, wv, bv))
    assert out_bf16.shape == (B, C, D)
    assert jnp.allclose(out_bf16, ref, atol=5e-2, rtol=5e-2), \
        "bf16 mismatch vs reference"

    print("KERNEL_OK")
</pallas_src>

<mosaic_0001>
module attributes {stable_mosaic.version = 11 : i64} {
  func.func @_qkv_proj_kernel(%arg0: i32, %arg1: memref<16x32xf32, #tpu.memory_space<vmem>>, %arg2: memref<32x48xf32, #tpu.memory_space<vmem>>, %arg3: memref<1x48xf32, #tpu.memory_space<vmem>>, %arg4: memref<16x16xf32, #tpu.memory_space<vmem>>, %arg5: memref<16x16xf32, #tpu.memory_space<vmem>>, %arg6: memref<16x16xf32, #tpu.memory_space<vmem>>) attributes {dimension_semantics = [#tpu.dimension_semantics<parallel>], iteration_bounds = array<i64: 1>, scalar_prefetch = 0 : i64, scratch_operands = 0 : i64, tpu.core_type = #tpu.core_type<tc>, window_params = [{transform_indices = @transform_0, window_bounds = array<i64: 16, 32>}, {pipeline_mode = #tpu.pipeline_mode<synchronous>, transform_indices = @transform_1, window_bounds = array<i64: 32, 48>}, {pipeline_mode = #tpu.pipeline_mode<synchronous>, transform_indices = @transform_2, window_bounds = array<i64: 1, 48>}, {transform_indices = @transform_3, window_bounds = array<i64: 16, 16>}, {transform_indices = @transform_4, window_bounds = array<i64: 16, 16>}, {transform_indices = @transform_5, window_bounds = array<i64: 16, 16>}]} {
    %c0 = arith.constant 0 : index
    %c0_0 = arith.constant 0 : index
    %0 = vector.load %arg1[%c0, %c0_0] : memref<16x32xf32, #tpu.memory_space<vmem>>, vector<16x32xf32>
    %c0_1 = arith.constant 0 : index
    %c0_2 = arith.constant 0 : index
    %1 = vector.load %arg2[%c0_1, %c0_2] : memref<32x48xf32, #tpu.memory_space<vmem>>, vector<32x48xf32>
    %cst = arith.constant dense<0.000000e+00> : vector<16x48xf32>
    %2 = tpu.matmul %0, %1, %cst {dimension_numbers = #tpu.dot_dimension_numbers<[1], [0], [0], [1], [0, 0, 1, 1], [], []>} : vector<16x32xf32>, vector<32x48xf32>, vector<16x48xf32> -> vector<16x48xf32>
    %c0_3 = arith.constant 0 : index
    %c0_4 = arith.constant 0 : index
    %3 = vector.load %arg3[%c0_3, %c0_4] : memref<1x48xf32, #tpu.memory_space<vmem>>, vector<1x48xf32>
    %4 = vector.broadcast %3 : vector<1x48xf32> to vector<16x48xf32>
    %5 = arith.addf %2, %4 : vector<16x48xf32>
    %6 = vector.extract_strided_slice %5 {offsets = [0, 0], sizes = [16, 16], strides = [1, 1]} : vector<16x48xf32> to vector<16x16xf32>
    %c0_5 = arith.constant 0 : index
    %c0_6 = arith.constant 0 : index
    %7 = vector.load %arg4[%c0_5, %c0_6] : memref<16x16xf32, #tpu.memory_space<vmem>>, vector<16x16xf32>
    tpu.vector_store %arg4[%c0_5, %c0_6], %6 {strides = array<i32>} : memref<16x16xf32, #tpu.memory_space<vmem>>, vector<16x16xf32>,
    %8 = vector.extract_strided_slice %5 {offsets = [0, 16], sizes = [16, 16], strides = [1, 1]} : vector<16x48xf32> to vector<16x16xf32>
    %c0_7 = arith.constant 0 : index
    %c0_8 = arith.constant 0 : index
    %9 = vector.load %arg5[%c0_7, %c0_8] : memref<16x16xf32, #tpu.memory_space<vmem>>, vector<16x16xf32>
    tpu.vector_store %arg5[%c0_7, %c0_8], %8 {strides = array<i32>} : memref<16x16xf32, #tpu.memory_space<vmem>>, vector<16x16xf32>,
    %10 = vector.extract_strided_slice %5 {offsets = [0, 32], sizes = [16, 16], strides = [1, 1]} : vector<16x48xf32> to vector<16x16xf32>
    %c0_9 = arith.constant 0 : index
    %c0_10 = arith.constant 0 : index
    %11 = vector.load %arg6[%c0_9, %c0_10] : memref<16x16xf32, #tpu.memory_space<vmem>>, vector<16x16xf32>
    tpu.vector_store %arg6[%c0_9, %c0_10], %10 {strides = array<i32>} : memref<16x16xf32, #tpu.memory_space<vmem>>, vector<16x16xf32>,
    return
  }
  func.func @transform_0(%arg0: i32) -> (i32, i32) {
    %c0_i32 = arith.constant 0 : i32
    %c0_i32_0 = arith.constant 0 : i32
    return %arg0, %c0_i32 : i32, i32
  }
  func.func @transform_1(%arg0: i32) -> (i32, i32) {
    %c0_i32 = arith.constant 0 : i32
    %c0_i32_0 = arith.constant 0 : i32
    %c0_i32_1 = arith.constant 0 : i32
    return %c0_i32, %c0_i32_0 : i32, i32
  }
  func.func @transform_2(%arg0: i32) -> (i32, i32) {
    %c0_i32 = arith.constant 0 : i32
    %c0_i32_0 = arith.constant 0 : i32
    %c0_i32_1 = arith.constant 0 : i32
    return %c0_i32, %c0_i32_0 : i32, i32
  }
  func.func @transform_3(%arg0: i32) -> (i32, i32) {
    %c0_i32 = arith.constant 0 : i32
    %c0_i32_0 = arith.constant 0 : i32
    return %arg0, %c0_i32 : i32, i32
  }
  func.func @transform_4(%arg0: i32) -> (i32, i32) {
    %c0_i32 = arith.constant 0 : i32
    %c0_i32_0 = arith.constant 0 : i32
    return %arg0, %c0_i32 : i32, i32
  }
  func.func @transform_5(%arg0: i32) -> (i32, i32) {
    %c0_i32 = arith.constant 0 : i32
    %c0_i32_0 = arith.constant 0 : i32
    return %arg0, %c0_i32 : i32, i32
  }
}

</mosaic_0001>

<llo_original>
// kernel: tpu_custom_call.1
$region0: #{tpu_custom_call.1}
  #allocation0 [shape = 'u32[]', space=smem, size = 0x4, offset = 0x4, fixed_abs, tag = 'smem constant byte address 0x4 - core index']
  #allocation1 [shape = 'u32[72,128]{1,0:T(1,128)}', space=vmem, size = 0x9000, scoped, tag = 'internal scratch']
  %s0 = inlined_call_operand.hbm [shape: f32[16,32], index: 0, kind: input, shape index: {}]
  %s1 = inlined_call_operand.hbm [shape: f32[32,48], index: 1, kind: input, shape index: {}]
  %s2 = inlined_call_operand.vmem [shape: f32[1,48], index: 2, kind: input, shape index: {}]
  %s3 = inlined_call_operand.hbm [shape: f32[16,16], index: 3, kind: output, shape index: {0}]
  %s4 = inlined_call_operand.hbm [shape: f32[16,16], index: 4, kind: output, shape index: {1}]
  %s5 = inlined_call_operand.hbm [shape: f32[16,16], index: 5, kind: output, shape index: {2}]
  %6 = xla_tuple %s3, %s4, %s5
  %s7 = sld [smem:[#allocation0]]
  $region46: #{tpu_custom_call.1} parent=0
    _
  %s9 = ssub.s32 1, %s7
  %s10 = scalar_select 0, %s9, %s7
  $region1: #{tpu_custom_call.1} parent=0
    #allocation2 [shape = 'u8[8192]{0}', space=vmem, size = 0x2000, scoped, tag = 'input window, operand 0, single buffered']
    #allocation3 [shape = 's32[1]{0}', space=sflag, size = 0x4, scoped, tag = 'scoped memory for tpu_custom_call.1']
    #allocation4 [shape = 's32[1]{0}', space=sflag, size = 0x4, scoped, tag = 'scoped memory for tpu_custom_call.1']
    #allocation5 [shape = 'u8[16384]{0}', space=vmem, size = 0x4000, scoped, tag = 'input window, operand 1, single buffered']
    #allocation6 [shape = 's32[1]{0}', space=sflag, size = 0x4, scoped, tag = 'scoped memory for tpu_custom_call.1']
    #allocation7 [shape = 'u8[8192]{0}', space=vmem, size = 0x2000, scoped, tag = 'output window, operand 0, single buffered']
    #allocation8 [shape = 'u8[8192]{0}', space=vmem, size = 0x2000, scoped, tag = 'output window, operand 1, single buffered']
    #allocation9 [shape = 's32[1]{0}', space=sflag, size = 0x4, scoped, tag = 'scoped memory for tpu_custom_call.1']
    #allocation10 [shape = 'u8[8192]{0}', space=vmem, size = 0x2000, scoped, tag = 'output window, operand 2, single buffered']
    %11 = vsyncpa [#allocation3], 0
    %12 = vsyncpa [#allocation6], 0
    %13 = vsyncpa [#allocation4], 0
    %14 = vsyncpa [#allocation9], 0
    // Predicated region
    $region2: #{tpu_custom_call.1} parent=1 // pred_check
      _
    $region3: #{tpu_custom_call.1} parent=1 // pred_check_branch
      %16 = sbr.rel (0) target = $region5
    $region4: #{tpu_custom_call.1} parent=1 // pred_region
      %18 = vsyncadd [#allocation3], 0
      %s19 = sshll.u32 %s0, 4
      %s20 = int_to_ptr.hbm [resolvable:$true] %s19
      %s21 = sshll.u32 [#allocation2], 4
      %s22 = int_to_ptr.vmem [resolvable:$true] %s21
      %27 = dma.hbm_to_vmem [thread:$0]  %s20, 256, %s22, [#allocation3], 128, 128, 8
    $region5: #{tpu_custom_call.1} parent=1 // pred_fallthru
      _
    // Predicated region
    $region6: #{tpu_custom_call.1} parent=1 // pred_check
      _
    $region7: #{tpu_custom_call.1} parent=1 // pred_check_branch
      %29 = sbr.rel (0) target = $region9
    $region8: #{tpu_custom_call.1} parent=1 // pred_region
      %31 = vsyncadd [#allocation6], 0
      %s32 = sshll.u32 %s1, 4
      %s33 = int_to_ptr.hbm [resolvable:$true] %s32
      %s34 = sshll.u32 [#allocation5], 4
      %s35 = int_to_ptr.vmem [resolvable:$true] %s34
      %40 = dma.hbm_to_vmem [thread:$0]  %s33, 512, %s35, [#allocation6], 128, 128, 8
    $region9: #{tpu_custom_call.1} parent=1 // pred_fallthru
      _
    // Predicated region
    $region10: #{tpu_custom_call.1} parent=1 // pred_check
      _
    $region11: #{tpu_custom_call.1} parent=1 // pred_check_branch
      %42 = sbr.rel (0) target = $region13
    $region12: #{tpu_custom_call.1} parent=1 // pred_region
      _
    $region13: #{tpu_custom_call.1} parent=1 // pred_fallthru
      _
    // Predicated region
    $region14: #{tpu_custom_call.1} parent=1 // pred_check
      _
    $region15: #{tpu_custom_call.1} parent=1 // pred_check_branch
      %44 = sbr.rel (0) target = $region17
    $region16: #{tpu_custom_call.1} parent=1 // pred_region
      %46 = dma.done [#allocation3], 256
    $region17: #{tpu_custom_call.1} parent=1 // pred_fallthru
      _
    // Predicated region
    $region18: #{tpu_custom_call.1} parent=1 // pred_check
      _
    $region19: #{tpu_custom_call.1} parent=1 // pred_check_branch
      %48 = sbr.rel (0) target = $region21
    $region20: #{tpu_custom_call.1} parent=1 // pred_region
      %50 = dma.done [#allocation6], 512
    $region21: #{tpu_custom_call.1} parent=1 // pred_fallthru
      _
    %v51 = vld [vmem:[#allocation2] sm:$0xff]
    %v52 = vld [vmem:[#allocation2 + $0x8] sm:$0xff]
    %v53 = vld [vmem:[#allocation5] sm:$0xff]
    %v54 = vld [vmem:[#allocation5 + $0x8] sm:$0xff]
    %v55 = vld [vmem:[#allocation5 + $0x10] sm:$0xff]
    %v56 = vld [vmem:[#allocation5 + $0x18] sm:$0xff]
    %v57 = vld [vmem:[%s2] sm:$0x1]
    %v59 = vperm.slane %v57, 0
    %vm61 = vcmask 261120
    %v63 = vsel %vm61, %v51, 0
    %v66 = vsel %vm61, %v52, 0
    %68 = vmatpush.msra.mxu0 0.0
    %69 = vmatpush.msra.mxu0 0.0
    %70 = vmatpush.msra.mxu0 0.0
    %71 = vmatpush.msra.mxu0 0.0
    %72 = vmatpush.msra.mxu0 0.0
    %73 = vmatpush.msra.mxu0 0.0
    %74 = vmatpush.msra.mxu0 0.0
    %75 = vmatpush.msra.mxu0 0.0
    %76 = vmatpush.msra.mxu0 0.0
    %77 = vmatpush.msra.mxu0 0.0
    %78 = vmatpush.msra.mxu0 0.0
    %79 = vmatpush.msra.mxu0 0.0
    %80 = vmatpush.msra.mxu0 %v56
    %81 = vmatpush.msra.mxu0 %v55
    %82 = vmatpush.msra.mxu0 %v54
    %83 = vmatpush.msra.mxu0 %v53
    %84 = vmatmul.f32.gmra.mxu0 %v63
    %v85 = vpop.f32.mrf.mxu0
    %v86 = vadd.f32 %v59, %v85
    %87 = vmatmul.f32.gmra.mxu0 %v66
    %v88 = vpop.f32.mrf.mxu0
    %v89 = vadd.f32 %v59, %v88
    %90 = vdwg.mxu0
    %vm91 = vcmask 130048
    %92 = vst.msk [vmem:[#allocation7] sm:$0xff] %vm91, %v86
    %93 = vst.msk [vmem:[#allocation7 + $0x8] sm:$0xff] %vm91, %v89
    %96 = vrot.lane.b32.xlu0 %v86, 112
    %v97 = vpop.permute.xlu0 %96
    %98 = vrot.lane.b32.xlu0 %v89, 112
    %v99 = vpop.permute.xlu0 %98
    %102 = vst.msk [vmem:[#allocation8] sm:$0xff] %vm91, %v97
    %103 = vst.msk [vmem:[#allocation8 + $0x8] sm:$0xff] %vm91, %v99
    %104 = vrot.lane.b32.xlu0 %v86, 96
    %v105 = vpop.permute.xlu0 %104
    %106 = vrot.lane.b32.xlu0 %v89, 96
    %v107 = vpop.permute.xlu0 %106
    %110 = vst.msk [vmem:[#allocation10] sm:$0xff] %vm91, %v105
    %111 = vst.msk [vmem:[#allocation10 + $0x8] sm:$0xff] %vm91, %v107
    // Predicated region
    $region22: #{tpu_custom_call.1} parent=1 // pred_check
      _
    $region23: #{tpu_custom_call.1} parent=1 // pred_check_branch
      %113 = sbr.rel (0) target = $region25
    $region24: #{tpu_custom_call.1} parent=1 // pred_region
      %115 = vsyncadd [#allocation4], 0
      %s116 = sshll.u32 [#allocation7], 4
      %s117 = int_to_ptr.vmem [resolvable:$true] %s116
      %s118 = sshll.u32 %s3, 4
      %s119 = int_to_ptr.hbm [resolvable:$true] %s118
      %124 = dma.vmem_to_hbm [thread:$0]  %s117, 256, %s119, [#allocation4], 128, 128, 8
    $region25: #{tpu_custom_call.1} parent=1 // pred_fallthru
      _
    // Predicated region
    $region26: #{tpu_custom_call.1} parent=1 // pred_check
      _
    $region27: #{tpu_custom_call.1} parent=1 // pred_check_branch
      %126 = sbr.rel (0) target = $region29
    $region28: #{tpu_custom_call.1} parent=1 // pred_region
      %128 = vsyncadd [#allocation9], 0
      %s129 = sshll.u32 [#allocation8], 4
      %s130 = int_to_ptr.vmem [resolvable:$true] %s129
      %s131 = sshll.u32 %s4, 4
      %s132 = int_to_ptr.hbm [resolvable:$true] %s131
      %137 = dma.vmem_to_hbm [thread:$0]  %s130, 256, %s132, [#allocation9], 128, 128, 8
    $region29: #{tpu_custom_call.1} parent=1 // pred_fallthru
      _
    // Predicated region
    $region30: #{tpu_custom_call.1} parent=1 // pred_check
      _
    $region31: #{tpu_custom_call.1} parent=1 // pred_check_branch
      %139 = sbr.rel (0) target = $region33
    $region32: #{tpu_custom_call.1} parent=1 // pred_region
      %141 = vsyncadd [#allocation9], 0
      %s142 = sshll.u32 [#allocation10], 4
      %s143 = int_to_ptr.vmem [resolvable:$true] %s142
      %s144 = sshll.u32 %s5, 4
      %s145 = int_to_ptr.hbm [resolvable:$true] %s144
      %150 = dma.vmem_to_hbm [thread:$0]  %s143, 256, %s145, [#allocation9], 128, 128, 8
    $region33: #{tpu_custom_call.1} parent=1 // pred_fallthru
      _
    // Predicated region
    $region34: #{tpu_custom_call.1} parent=1 // pred_check
      _
    $region35: #{tpu_custom_call.1} parent=1 // pred_check_branch
      %152 = sbr.rel (0) target = $region37
    $region36: #{tpu_custom_call.1} parent=1 // pred_region
      %154 = dma.done [#allocation4], 256
    $region37: #{tpu_custom_call.1} parent=1 // pred_fallthru
      _
    // Predicated region
    $region38: #{tpu_custom_call.1} parent=1 // pred_check
      _
    $region39: #{tpu_custom_call.1} parent=1 // pred_check_branch
      %156 = sbr.rel (0) target = $region41
    $region40: #{tpu_custom_call.1} parent=1 // pred_region
      %158 = dma.done [#allocation9], 256
    $region41: #{tpu_custom_call.1} parent=1 // pred_fallthru
      _
    // Predicated region
    $region42: #{tpu_custom_call.1} parent=1 // pred_check
      _
    $region43: #{tpu_custom_call.1} parent=1 // pred_check_branch
      %160 = sbr.rel (0) target = $region45
    $region44: #{tpu_custom_call.1} parent=1 // pred_region
      %162 = dma.done [#allocation9], 256
    $region45: #{tpu_custom_call.1} parent=1 // pred_fallthru
      _
    %163 = vsyncpa [#allocation3], 1
    %164 = vsyncpa [#allocation6], 1
    %165 = vsyncpa [#allocation4], 1
    %166 = vsyncpa [#allocation9], 1

</llo_original>
